<compile_context>
chip_gen: v7x
topology: tpu7x:2x2x1
jax: 0.10.0
libtpu: 0.0.40
codegen_flags: <defaults>
</compile_context>

<pallas_src>
import functools

import jax
import jax.numpy as jnp
from jax import lax
from jax.experimental import pallas as pl
from jax.experimental.pallas import tpu as pltpu

_LANES = 128
_MAX_BLK_R = 2048      # rows per grid step -> 1 MiB f32 per input block
_LOG_CLAMP = -100.0    # nn.BCELoss clamps log terms at -100


def _bce_elementwise(p, y):
    p = p.astype(jnp.float32)
    y = y.astype(jnp.float32)
    log_p = jnp.maximum(jnp.log(p), _LOG_CLAMP)
    log_1mp = jnp.maximum(jnp.log(1.0 - p), _LOG_CLAMP)
    return -(y * log_p + (1.0 - y) * log_1mp)


def _bce_sum_kernel(p_ref, y_ref, o_ref, *, n_elem, blk_r, blocks_per_core):
    c = pl.program_id(0)   # core-split axis ("parallel")
    k = pl.program_id(1)   # reduction axis ("arbitrary", last)

    @pl.when(k == 0)
    def _():
        o_ref[...] = jnp.zeros_like(o_ref)

    loss = _bce_elementwise(p_ref[...], y_ref[...])   # (blk_r, 128) f32

    # Mask everything past the true element count: covers the lane pad, the
    # partial last row-block and any clamped/out-of-range block of core 1.
    # NaNs in the masked region do not propagate through the select.
    blk = c * blocks_per_core + k
    row = lax.broadcasted_iota(jnp.int32, (blk_r, _LANES), 0)
    lane = lax.broadcasted_iota(jnp.int32, (blk_r, _LANES), 1)
    idx = (blk * blk_r + row) * _LANES + lane         # int32: ok for n < 2^31
    loss = jnp.where(idx < n_elem, loss, 0.0)

    # vreg-shaped accumulation: plain VPU adds, no per-step cross-lane reduce.
    o_ref[...] += loss.reshape(-1, 8, _LANES).sum(axis=0)


def _bce_none_kernel(p_ref, y_ref, o_ref):
    o_ref[...] = _bce_elementwise(p_ref[...], y_ref[...]).astype(o_ref.dtype)


def _to_lane_dense(x):
    """Flatten to (rows, 128) in the ORIGINAL dtype (lane-pad only if needed)."""
    flat = x.reshape(-1)
    n = flat.shape[0]
    rows = pl.cdiv(n, _LANES)
    pad = rows * _LANES - n
    if pad:
        flat = jnp.pad(flat, (0, pad))
    return flat.reshape(rows, _LANES)


@functools.partial(jax.jit, static_argnames=("reduction",))
def bce_loss(preds, labels, reduction="mean"):
    assert reduction in ("mean", "sum", "none")
    orig_shape = preds.shape
    orig_dtype = preds.dtype
    n = preds.size

    p2d = _to_lane_dense(preds)
    y2d = _to_lane_dense(labels)
    rows = p2d.shape[0]
    blk_r = min(_MAX_BLK_R, pl.cdiv(rows, 8) * 8)     # multiple of 8 sublanes
    nb = pl.cdiv(rows, blk_r)                          # total row blocks

    if reduction == "none":
        out2d = pl.pallas_call(
            _bce_none_kernel,
            out_shape=jax.ShapeDtypeStruct((rows, _LANES), orig_dtype),
            grid=(nb,),
            in_specs=[
                pl.BlockSpec((blk_r, _LANES), lambda i: (i, 0)),
                pl.BlockSpec((blk_r, _LANES), lambda i: (i, 0)),
            ],
            out_specs=pl.BlockSpec((blk_r, _LANES), lambda i: (i, 0)),
            compiler_params=pltpu.CompilerParams(
                dimension_semantics=("parallel",)
            ),
        )(p2d, y2d)
        return out2d.reshape(-1)[:n].reshape(orig_shape)

    # 'sum' / 'mean'
    n_cores = 2 if nb >= 2 else 1
    npc = pl.cdiv(nb, n_cores)                         # row blocks per core

    def in_map(c, k):
        # Clamp so an odd block count never issues a fully out-of-range DMA
        # for core 1; its contribution is zeroed by the in-kernel mask.
        return (jnp.minimum(c * npc + k, nb - 1), 0)

    kernel = functools.partial(
        _bce_sum_kernel, n_elem=n, blk_r=blk_r, blocks_per_core=npc)

    partials = pl.pallas_call(
        kernel,
        out_shape=jax.ShapeDtypeStruct((n_cores * 8, _LANES), jnp.float32),
        grid=(n_cores, npc),
        in_specs=[
            pl.BlockSpec((blk_r, _LANES), in_map),
            pl.BlockSpec((blk_r, _LANES), in_map),
        ],
        out_specs=pl.BlockSpec((8, _LANES), lambda c, k: (c, 0)),
        compiler_params=pltpu.CompilerParams(
            dimension_semantics=("parallel", "arbitrary")
        ),
    )(p2d, y2d)

    total = jnp.sum(partials)                          # tiny XLA epilogue
    if reduction == "mean":
        total = total / jnp.float32(n)
    return total.astype(orig_dtype)


def _reference(preds, labels, reduction):
    loss = _bce_elementwise(preds, labels)
    if reduction == "mean":
        return jnp.mean(loss)
    if reduction == "sum":
        return jnp.sum(loss)
    return loss


if __name__ == "__main__":
    key = jax.random.PRNGKey(0)
    k1, k2 = jax.random.split(key)
    # Small NCHW-like shapes: batch=2, channels=4, spatial=16x16.
    preds = jax.nn.sigmoid(jax.random.normal(k1, (2, 4, 16, 16), jnp.float32))
    labels = (jax.random.uniform(k2, (2, 4, 16, 16)) > 0.5).astype(jnp.float32)

    ok = True
    for reduction in ("mean", "sum", "none"):
        out = bce_loss(preds, labels, reduction=reduction)
        out = jax.block_until_ready(out)
        ref = _reference(preds, labels, reduction)
        if not jnp.allclose(out, ref, rtol=1e-5, atol=1e-5):
            ok = False
            print(f"MISMATCH for reduction={reduction}")

    if ok:
        print("KERNEL_OK")
</pallas_src>

<mosaic_0001>
module attributes {stable_mosaic.version = 11 : i64} {
  func.func @_bce_sum_kernel(%arg0: i32, %arg1: i32, %arg2: memref<16x128xf32, #tpu.memory_space<vmem>>, %arg3: memref<16x128xf32, #tpu.memory_space<vmem>>, %arg4: memref<8x128xf32, #tpu.memory_space<vmem>>) attributes {dimension_semantics = [#tpu.dimension_semantics<parallel>, #tpu.dimension_semantics<arbitrary>], iteration_bounds = array<i64: 1, 1>, scalar_prefetch = 0 : i64, scratch_operands = 0 : i64, tpu.core_type = #tpu.core_type<tc>, window_params = [{transform_indices = @transform_0, window_bounds = array<i64: 16, 128>}, {transform_indices = @transform_1, window_bounds = array<i64: 16, 128>}, {transform_indices = @transform_2, window_bounds = array<i64: 8, 128>}]} {
    %c0_i32 = arith.constant 0 : i32
    %0 = arith.cmpi eq, %arg1, %c0_i32 : i32
    %1 = arith.extui %0 : i1 to i32
    %c0_i32_0 = arith.constant 0 : i32
    %2 = arith.cmpi ne, %1, %c0_i32_0 : i32
    scf.if %2 {
      %cst_14 = arith.constant 0.000000e+00 : f32
      %39 = vector.broadcast %cst_14 : f32 to vector<8x128xf32>
      %c0_15 = arith.constant 0 : index
      %c0_16 = arith.constant 0 : index
      %40 = vector.load %arg4[%c0_15, %c0_16] : memref<8x128xf32, #tpu.memory_space<vmem>>, vector<8x128xf32>
      tpu.vector_store %arg4[%c0_15, %c0_16], %39 {strides = array<i32>} : memref<8x128xf32, #tpu.memory_space<vmem>>, vector<8x128xf32>,
    } else {
    }
    %c0 = arith.constant 0 : index
    %c0_1 = arith.constant 0 : index
    %3 = vector.load %arg2[%c0, %c0_1] : memref<16x128xf32, #tpu.memory_space<vmem>>, vector<16x128xf32>
    %c0_2 = arith.constant 0 : index
    %c0_3 = arith.constant 0 : index
    %4 = vector.load %arg3[%c0_2, %c0_3] : memref<16x128xf32, #tpu.memory_space<vmem>>, vector<16x128xf32>
    %5 = math.log %3 : vector<16x128xf32>
    %cst = arith.constant -1.000000e+02 : f32
    %6 = vector.broadcast %cst : f32 to vector<16x128xf32>
    %7 = arith.maximumf %5, %6 : vector<16x128xf32>
    %cst_4 = arith.constant 1.000000e+00 : f32
    %8 = vector.broadcast %cst_4 : f32 to vector<16x128xf32>
    %9 = arith.subf %8, %3 : vector<16x128xf32>
    %10 = math.log %9 : vector<16x128xf32>
    %cst_5 = arith.constant -1.000000e+02 : f32
    %11 = vector.broadcast %cst_5 : f32 to vector<16x128xf32>
    %12 = arith.maximumf %10, %11 : vector<16x128xf32>
    %13 = arith.mulf %4, %7 : vector<16x128xf32>
    %cst_6 = arith.constant 1.000000e+00 : f32
    %14 = vector.broadcast %cst_6 : f32 to vector<16x128xf32>
    %15 = arith.subf %14, %4 : vector<16x128xf32>
    %16 = arith.mulf %15, %12 : vector<16x128xf32>
    %17 = arith.addf %13, %16 : vector<16x128xf32>
    %cst_7 = arith.constant 0.000000e+00 : f32
    %18 = vector.broadcast %cst_7 : f32 to vector<16x128xf32>
    %19 = arith.subf %18, %17 : vector<16x128xf32>
    %c1_i32 = arith.constant 1 : i32
    %20 = arith.muli %arg0, %c1_i32 : i32
    %21 = arith.addi %20, %arg1 : i32
    %22 = tpu.iota {dimensions = array<i32: 0>} : vector<16x128xi32>
    %23 = tpu.iota {dimensions = array<i32: 1>} : vector<16x128xi32>
    %c16_i32 = arith.constant 16 : i32
    %24 = arith.muli %21, %c16_i32 : i32
    %25 = vector.broadcast %24 : i32 to vector<16x128xi32>
    %26 = arith.addi %25, %22 : vector<16x128xi32>
    %c128_i32 = arith.constant 128 : i32
    %27 = vector.broadcast %c128_i32 : i32 to vector<16x128xi32>
    %28 = arith.muli %26, %27 : vector<16x128xi32>
    %29 = arith.addi %28, %23 : vector<16x128xi32>
    %c2048_i32 = arith.constant 2048 : i32
    %30 = vector.broadcast %c2048_i32 : i32 to vector<16x128xi32>
    %31 = arith.cmpi slt, %29, %30 : vector<16x128xi32>
    %cst_8 = arith.constant 0.000000e+00 : f32
    %32 = vector.broadcast %cst_8 : f32 to vector<16x128xf32>
    %33 = arith.select %31, %19, %32 : vector<16x128xi1>, vector<16x128xf32>
    %c0_9 = arith.constant 0 : index
    %c0_10 = arith.constant 0 : index
    %34 = vector.load %arg4[%c0_9, %c0_10] : memref<8x128xf32, #tpu.memory_space<vmem>>, vector<8x128xf32>
    %35 = vector.shape_cast %33 : vector<16x128xf32> to vector<2x8x128xf32>
    %cst_11 = arith.constant dense<0.000000e+00> : vector<8x128xf32>
    %36 = vector.multi_reduction <add>, %35, %cst_11 [0] : vector<2x8x128xf32> to vector<8x128xf32>
    %37 = arith.addf %34, %36 : vector<8x128xf32>
    %c0_12 = arith.constant 0 : index
    %c0_13 = arith.constant 0 : index
    %38 = vector.load %arg4[%c0_12, %c0_13] : memref<8x128xf32, #tpu.memory_space<vmem>>, vector<8x128xf32>
    tpu.vector_store %arg4[%c0_12, %c0_13], %37 {strides = array<i32>} : memref<8x128xf32, #tpu.memory_space<vmem>>, vector<8x128xf32>,
    return
  }
  func.func @transform_0(%arg0: i32, %arg1: i32) -> (i32, i32) {
    %c1_i32 = arith.constant 1 : i32
    %0 = arith.muli %arg0, %c1_i32 : i32
    %1 = arith.addi %0, %arg1 : i32
    %c0_i32 = arith.constant 0 : i32
    %2 = arith.minsi %1, %c0_i32 : i32
    %c0_i32_0 = arith.constant 0 : i32
    %c0_i32_1 = arith.constant 0 : i32
    return %2, %c0_i32_0 : i32, i32
  }
  func.func @transform_1(%arg0: i32, %arg1: i32) -> (i32, i32) {
    %c1_i32 = arith.constant 1 : i32
    %0 = arith.muli %arg0, %c1_i32 : i32
    %1 = arith.addi %0, %arg1 : i32
    %c0_i32 = arith.constant 0 : i32
    %2 = arith.minsi %1, %c0_i32 : i32
    %c0_i32_0 = arith.constant 0 : i32
    %c0_i32_1 = arith.constant 0 : i32
    return %2, %c0_i32_0 : i32, i32
  }
  func.func @transform_2(%arg0: i32, %arg1: i32) -> (i32, i32) {
    %c0_i32 = arith.constant 0 : i32
    %c0_i32_0 = arith.constant 0 : i32
    return %arg0, %c0_i32 : i32, i32
  }
}

</mosaic_0001>

<llo_original>
// kernel: bce_loss.1
$region0: #{bce_loss.1}
  #allocation0 [shape = 'u32[]', space=smem, size = 0x4, offset = 0x4, fixed_abs, tag = 'smem constant byte address 0x4 - core index']
  #allocation1 [shape = 'u32[144,128]{1,0:T(1,128)}', space=vmem, size = 0x12000, scoped, tag = 'internal scratch']
  %s0 = inlined_call_operand.vmem [shape: f32[16,128], index: 0, kind: input, shape index: {}]
  %s1 = inlined_call_operand.vmem [shape: f32[16,128], index: 1, kind: input, shape index: {}]
  %s2 = inlined_call_operand.vmem [shape: f32[8,128], index: 2, kind: output, shape index: {}]
  %s3 = sld [smem:[#allocation0]]
  $region22: #{bce_loss.1} parent=0
    _
  %s5 = ssub.s32 1, %s3
  %s6 = scalar_select 0, %s5, %s3
  // Predicated region
  $region2: #{bce_loss.1} parent=0 // pred_check
    _
  $region3: #{bce_loss.1} parent=0 // pred_check_branch
    %8 = sbr.rel (0) target = $region5
  $region4: #{bce_loss.1} parent=0 // pred_region
    %s9 = sadd.s32 0, 0
    %p10 = scmp.lt.s32.totalorder %s9, 0
    %s11 = scalar_select %p10, %s9, 0
    %s12 = smul.u32 2, %s11
    %p13 = scmp.lt.s32.totalorder %s12, 1
    %s14 = scalar_select %p13, %s12, 1
    %s15 = smul.addr %s14, 8
    %s16 = scalar_lea.vmem %s0, %s15
    %s17 = sadd.s32 0, 0
    %p18 = scmp.lt.s32.totalorder %s17, 0
    %s19 = scalar_select %p18, %s17, 0
    %s20 = smul.u32 2, %s19
  $region5: #{bce_loss.1} parent=0 // pred_fallthru
    _
  // Predicated region
  $region6: #{bce_loss.1} parent=0 // pred_check
    _
  $region7: #{bce_loss.1} parent=0 // pred_check_branch
    %22 = sbr.rel (0) target = $region9
  $region8: #{bce_loss.1} parent=0 // pred_region
    %s23 = sadd.s32 0, 0
    %p24 = scmp.lt.s32.totalorder %s23, 0
    %s25 = scalar_select %p24, %s23, 0
    %s26 = smul.u32 2, %s25
    %p27 = scmp.lt.s32.totalorder %s26, 1
    %s28 = scalar_select %p27, %s26, 1
    %s29 = smul.addr %s28, 8
    %s30 = scalar_lea.vmem %s1, %s29
    %s31 = sadd.s32 0, 0
    %p32 = scmp.lt.s32.totalorder %s31, 0
    %s33 = scalar_select %p32, %s31, 0
    %s34 = smul.u32 2, %s33
  $region9: #{bce_loss.1} parent=0 // pred_fallthru
    _
  %s35 = sadd.s32 0, 0
  %p36 = scmp.lt.s32.totalorder %s35, 0
  %s37 = scalar_select %p36, %s35, 0
  %s38 = smul.u32 2, %s37
  %p39 = scmp.lt.s32.totalorder %s38, 1
  %s40 = scalar_select %p39, %s38, 1
  %s41 = smul.addr %s40, 8
  %s42 = scalar_lea.vmem %s0, %s41
  %s43 = sadd.s32 0, 0
  %p44 = scmp.lt.s32.totalorder %s43, 0
  %s45 = scalar_select %p44, %s43, 0
  %s46 = smul.u32 2, %s45
  %p47 = scmp.lt.s32.totalorder %s46, 1
  %s48 = scalar_select %p47, %s46, 1
  %s49 = smul.addr %s48, 8
  %s50 = scalar_lea.vmem %s1, %s49
  %s51 = sadd.s32 0, 0
  %p52 = scmp.lt.s32.totalorder %s51, 0
  %s53 = scalar_select %p52, %s51, 0
  %s54 = smul.u32 2, %s53
  %p55 = scmp.lt.s32.totalorder %s54, 1
  %s56 = scalar_select %p55, %s54, 1
  %s57 = smul.addr %s56, 8
  %s58 = scalar_lea.vmem %s0, %s57
  %s59 = sadd.s32 0, 0
  %p60 = scmp.lt.s32.totalorder %s59, 0
  %s61 = scalar_select %p60, %s59, 0
  %s62 = smul.u32 2, %s61
  %s63 = sadd.s32 0, 0
  %p64 = scmp.lt.s32.totalorder %s63, 0
  %s65 = scalar_select %p64, %s63, 0
  %s66 = smul.u32 2, %s65
  %p67 = scmp.lt.s32.totalorder %s66, 1
  %s68 = scalar_select %p67, %s66, 1
  %s69 = smul.addr %s68, 8
  %s70 = scalar_lea.vmem %s1, %s69
  %s71 = sadd.s32 0, 0
  %p72 = scmp.lt.s32.totalorder %s71, 0
  %s73 = scalar_select %p72, %s71, 0
  %s74 = smul.u32 2, %s73
  %p75 = scmp.eq.s32.totalorder 0, 0
  // Predicated region
  $region10: #{bce_loss.1} parent=0 // pred_check
    %p76 = pneg %p75
  $region11: #{bce_loss.1} parent=0 // pred_check_branch
    %78 = sbr.rel (%p76) target = $region13
  $region12: #{bce_loss.1} parent=0 // pred_region
    %79 = vst [vmem:[%s2] sm:$0xff] 0.0
  $region13: #{bce_loss.1} parent=0 // pred_fallthru
    _
  %v80 = vld [vmem:[%s58] sm:$0xff]
  %v81 = vld [vmem:[%s58 + $0x8] sm:$0xff]
  %v82 = vld [vmem:[%s70] sm:$0xff]
  %v83 = vld [vmem:[%s70 + $0x8] sm:$0xff]
  %v84 = vlog2.pop %v80
  %v85 = vmul.f32 %v84, 0.6931472
  %v86 = vlog2.pop %v81
  %v87 = vmul.f32 %v86, 0.6931472
  %v88 = vmax.f32 %v85, -100.0
  %v89 = vmax.f32 %v87, -100.0
  %v90 = vsub.f32 1.0, %v80
  %v91 = vsub.f32 1.0, %v81
  %v92 = vlog2.pop %v90
  %v93 = vmul.f32 %v92, 0.6931472
  %v94 = vlog2.pop %v91
  %v95 = vmul.f32 %v94, 0.6931472
  %v96 = vmax.f32 %v93, -100.0
  %v97 = vmax.f32 %v95, -100.0
  %v98 = vmul.f32 %v82, %v88
  %v99 = vmul.f32 %v83, %v89
  %v100 = vsub.f32 1.0, %v82
  %v101 = vsub.f32 1.0, %v83
  %v102 = vmul.f32 %v100, %v96
  %v103 = vmul.f32 %v101, %v97
  %v104 = vadd.f32 %v98, %v102
  %v105 = vadd.f32 %v99, %v103
  %v106 = vsub.f32 0.0, %v104
  %v107 = vsub.f32 0.0, %v105
  %s108 = sadd.s32 0, 0
  %v109 = vlaneseq
  %v110 = vshrl.u32 %v109, 7
  %v111 = vadd.s32 %v110, 8
  %v112 = vlaneseq
  %v113 = vand.u32 %v112, 127
  %s114 = smul.u32 %s108, 16
  %v115 = vstv %s114
  %v116 = vadd.s32 %v115, %v110
  %v117 = vadd.s32 %v115, %v111
  %v118 = vmul.u32 %v116, 128
  %v119 = vmul.u32 %v117, 128
  %v120 = vadd.s32 %v118, %v113
  %v121 = vadd.s32 %v119, %v113
  %vm122 = vcmp.lt.s32.totalorder %v120, 2048
  %vm123 = vcmp.lt.s32.totalorder %v121, 2048
  %v124 = vsel %vm122, %v106, 0.0
  %v125 = vsel %vm123, %v107, 0.0
  %v126 = vld [vmem:[%s2] sm:$0xff]
  %v127 = vadd.f32 %v124, %v125
  %v128 = vadd.f32 %v126, %v127
  %129 = vst [vmem:[%s2] sm:$0xff] %v128
  // Predicated region
  $region14: #{bce_loss.1} parent=0 // pred_check
    _
  $region15: #{bce_loss.1} parent=0 // pred_check_branch
    %131 = sbr.rel (0) target = $region17
  $region16: #{bce_loss.1} parent=0 // pred_region
    _
  $region17: #{bce_loss.1} parent=0 // pred_fallthru
    _
  // Predicated region
  $region18: #{bce_loss.1} parent=0 // pred_check
    _
  $region19: #{bce_loss.1} parent=0 // pred_check_branch
    %133 = sbr.rel (0) target = $region21
  $region20: #{bce_loss.1} parent=0 // pred_region
    _
  $region21: #{bce_loss.1} parent=0 // pred_fallthru
    _

</llo_original>
